<compile_context>
chip_gen: v5e
topology: v5e:2x2
jax: 0.10.0
libtpu: 0.0.40
codegen_flags: <defaults>
</compile_context>

<pallas_src>
import functools

import jax
import jax.numpy as jnp
from jax import lax
from jax.experimental import pallas as pl
from jax.experimental.pallas import tpu as pltpu


def _koleo_kernel(x_ref, out_ref, g2_ref, s_ref, *, B, D, eps_norm, eps_dist):
    k = pl.program_id(0)

    @pl.when(k == 0)
    def _init():
        g2_ref[...] = jnp.zeros_like(g2_ref)
        s_ref[...] = jnp.zeros_like(s_ref)

    xt = x_ref[...].astype(jnp.float32)            # [B, TD]
    # Contract the D axis of both operands (== xt @ (xt - 2*eps_d)^T).
    dn = (((1,), (1,)), ((), ()))
    g2_ref[...] += lax.dot_general(xt, xt - 2.0 * eps_dist, dn,
                                   preferred_element_type=jnp.float32)
    s_ref[...] += jnp.sum(xt, axis=1, keepdims=True)

    @pl.when(k == pl.num_programs(0) - 1)
    def _finalize():
        g2 = g2_ref[...]                           # [B,B]: <x_i,x_j> - 2*eps_d*s_i
        s_col = s_ref[...]                         # [B,1]: s_i
        gram = g2 + 2.0 * eps_dist * s_col         # [B,B]: <x_i, x_j>

        row = lax.broadcasted_iota(jnp.int32, (B, B), 0)
        col = lax.broadcasted_iota(jnp.int32, (B, B), 1)
        diag = row == col

        gram_diag = jnp.where(diag, gram, 0.0)
        sq_col = jnp.sum(gram_diag, axis=1, keepdims=True)   # ||x_i||^2   [B,1]
        sq_row = jnp.sum(gram_diag, axis=0, keepdims=True)   # ||x_j||^2   [1,B]
        # ||x_j||^2 - 2*eps_d*s_j, already row-oriented (no transpose needed).
        r_row = jnp.sum(jnp.where(diag, g2, 0.0), axis=0, keepdims=True)  # [1,B]

        # Cosine similarities of F.normalize'd vectors; diagonal filled with -1.
        n_col = jnp.maximum(jnp.sqrt(sq_col), eps_norm)
        n_row = jnp.maximum(jnp.sqrt(sq_row), eps_norm)
        dots = gram / (n_col * n_row)
        dots = jnp.where(diag, -1.0, dots)

        # argmax per row (first index on ties, like torch.max).
        max_val = jnp.max(dots, axis=1, keepdims=True)            # [B,1]
        is_max = dots >= max_val
        first_idx = jnp.min(jnp.where(is_max, col, B), axis=1, keepdims=True)
        onehot = (col == first_idx).astype(jnp.float32)           # [B,B]

        # dist^2[i] = ||x_i - x_{I[i]} + eps_d||^2 via the gram expansion.
        nn_term = jnp.sum(onehot * (r_row - 2.0 * gram), axis=1, keepdims=True)
        dist_sq = sq_col + 2.0 * eps_dist * s_col + (D * eps_dist * eps_dist) + nn_term
        dist_sq = jnp.maximum(dist_sq, D * eps_dist * eps_dist)   # numerical guard

        # -mean(log(sqrt(dist_sq))) = -0.5 * mean(log(dist_sq))
        out_ref[0, 0] = -0.5 * jnp.mean(jnp.log(dist_sq))


def _pick_tile(D):
    # Lane-dense tiles, ~512 wide (measured sweet spot for pipelined reductions);
    # fall back to full D when D is small / not 128-aligned.
    for td in (512, 256, 128):
        if D % td == 0:
            return td
    return D


def koleo_loss(student_output, eps=1e-8):
    x = student_output
    B, D = x.shape
    eps_dist = 1e-6                      # nn.PairwiseDistance(2, eps=1e-06)
    TD = _pick_tile(D)
    grid = (D // TD,)

    kernel = functools.partial(
        _koleo_kernel, B=B, D=D, eps_norm=float(eps), eps_dist=eps_dist)

    itemsize = jnp.dtype(x.dtype).itemsize
    cost = pl.CostEstimate(
        flops=2 * B * B * D + 2 * B * D,
        transcendentals=B,
        bytes_accessed=B * D * itemsize + 4,
    )

    # Keep the double-buffered x tiles + [B,B] scratch comfortably inside the
    # scoped VMEM default (16 MiB v5e / 32 MiB v6e-v7x); only raise the limit
    # when the working set actually needs it (with headroom, capped for v7x).
    vmem_need = 2 * 2 * B * TD * itemsize + 6 * B * max(B, 128) * 4
    cp_kwargs = dict(dimension_semantics=("arbitrary",))
    if vmem_need > (12 << 20):
        cp_kwargs["vmem_limit_bytes"] = min(vmem_need + (8 << 20), 48 << 20)

    out = pl.pallas_call(
        kernel,
        out_shape=jax.ShapeDtypeStruct((1, 1), jnp.float32),
        grid=grid,
        in_specs=[pl.BlockSpec((B, TD), lambda k: (0, k))],
        out_specs=pl.BlockSpec(memory_space=pltpu.SMEM),
        scratch_shapes=[
            pltpu.VMEM((B, B), jnp.float32),   # G2 accumulator
            pltpu.VMEM((B, 1), jnp.float32),   # row-sum accumulator
        ],
        compiler_params=pltpu.CompilerParams(**cp_kwargs),
        cost_estimate=cost,
    )(x)
    return out[0, 0]


def _koleo_ref(x, eps=1e-8):
    """Pure-JAX mirror of the PyTorch KoLeoLoss forward."""
    B = x.shape[0]
    norms = jnp.sqrt(jnp.sum(x * x, axis=-1, keepdims=True))
    xn = x / jnp.maximum(norms, eps)
    dots = xn @ xn.T
    dots = dots.at[jnp.arange(B), jnp.arange(B)].set(-1.0)
    idx = jnp.argmax(dots, axis=1)
    diff = x - x[idx] + 1e-6
    dist = jnp.sqrt(jnp.sum(diff * diff, axis=-1))
    return -jnp.mean(jnp.log(dist))


if __name__ == "__main__":
    B, D = 8, 1024   # student_output: [batch, embed_dim]; D tiled 2x512 -> 2 grid steps
    key = jax.random.PRNGKey(0)
    x = jax.random.normal(key, (B, D), dtype=jnp.float32)

    loss = jax.block_until_ready(koleo_loss(x))
    ref = jax.block_until_ready(_koleo_ref(x))

    assert jnp.isfinite(loss), loss
    assert jnp.allclose(loss, ref, atol=1e-3, rtol=1e-3), (loss, ref)
    print("KERNEL_OK")
</pallas_src>

<mosaic_0001>
module attributes {stable_mosaic.version = 11 : i64} {
  func.func @_koleo_kernel(%arg0: i32, %arg1: memref<8x512xf32, #tpu.memory_space<vmem>>, %arg2: memref<1x1xf32, #tpu.memory_space<smem>>, %arg3: memref<8x8xf32, #tpu.memory_space<vmem>>, %arg4: memref<8x1xf32, #tpu.memory_space<vmem>>) attributes {dimension_semantics = [#tpu.dimension_semantics<arbitrary>], iteration_bounds = array<i64: 2>, scalar_prefetch = 0 : i64, scratch_operands = 2 : i64, tpu.core_type = #tpu.core_type<tc>, window_params = [{transform_indices = @transform_0, window_bounds = array<i64: 8, 512>}, {transform_indices = @transform_1, window_bounds = array<i64: 1, 1>}]} {
    %c0_i32 = arith.constant 0 : i32
    %0 = arith.cmpi eq, %arg0, %c0_i32 : i32
    %1 = arith.extui %0 : i1 to i32
    %c0_i32_0 = arith.constant 0 : i32
    %2 = arith.cmpi ne, %1, %c0_i32_0 : i32
    scf.if %2 {
      %cst_13 = arith.constant 0.000000e+00 : f32
      %18 = vector.broadcast %cst_13 : f32 to vector<8x8xf32>
      %c0_14 = arith.constant 0 : index
      %c0_15 = arith.constant 0 : index
      %19 = vector.load %arg3[%c0_14, %c0_15] : memref<8x8xf32, #tpu.memory_space<vmem>>, vector<8x8xf32>
      tpu.vector_store %arg3[%c0_14, %c0_15], %18 {strides = array<i32>} : memref<8x8xf32, #tpu.memory_space<vmem>>, vector<8x8xf32>,
      %cst_16 = arith.constant 0.000000e+00 : f32
      %20 = vector.broadcast %cst_16 : f32 to vector<8x1xf32>
      %c0_17 = arith.constant 0 : index
      %c0_18 = arith.constant 0 : index
      %21 = vector.load %arg4[%c0_17, %c0_18] : memref<8x1xf32, #tpu.memory_space<vmem>>, vector<8x1xf32>
      tpu.vector_store %arg4[%c0_17, %c0_18], %20 {strides = array<i32>} : memref<8x1xf32, #tpu.memory_space<vmem>>, vector<8x1xf32>,
    } else {
    }
    %c0 = arith.constant 0 : index
    %c0_1 = arith.constant 0 : index
    %3 = vector.load %arg1[%c0, %c0_1] : memref<8x512xf32, #tpu.memory_space<vmem>>, vector<8x512xf32>
    %c0_2 = arith.constant 0 : index
    %c0_3 = arith.constant 0 : index
    %4 = vector.load %arg3[%c0_2, %c0_3] : memref<8x8xf32, #tpu.memory_space<vmem>>, vector<8x8xf32>
    %cst = arith.constant 2.000000e-06 : f32
    %5 = vector.broadcast %cst : f32 to vector<8x512xf32>
    %6 = arith.subf %3, %5 : vector<8x512xf32>
    %cst_4 = arith.constant dense<0.000000e+00> : vector<8x8xf32>
    %7 = tpu.matmul %3, %6, %cst_4 {dimension_numbers = #tpu.dot_dimension_numbers<[1], [1], [0], [0], [0, 0, 1, 0], [], []>} : vector<8x512xf32>, vector<8x512xf32>, vector<8x8xf32> -> vector<8x8xf32>
    %8 = arith.addf %4, %7 : vector<8x8xf32>
    %c0_5 = arith.constant 0 : index
    %c0_6 = arith.constant 0 : index
    %9 = vector.load %arg3[%c0_5, %c0_6] : memref<8x8xf32, #tpu.memory_space<vmem>>, vector<8x8xf32>
    tpu.vector_store %arg3[%c0_5, %c0_6], %8 {strides = array<i32>} : memref<8x8xf32, #tpu.memory_space<vmem>>, vector<8x8xf32>,
    %c0_7 = arith.constant 0 : index
    %c0_8 = arith.constant 0 : index
    %10 = vector.load %arg4[%c0_7, %c0_8] : memref<8x1xf32, #tpu.memory_space<vmem>>, vector<8x1xf32>
    %cst_9 = arith.constant dense<0.000000e+00> : vector<8xf32>
    %11 = vector.multi_reduction <add>, %3, %cst_9 [1] : vector<8x512xf32> to vector<8xf32>
    %12 = vector.shape_cast %11 : vector<8xf32> to vector<8x1xf32>
    %13 = arith.addf %10, %12 : vector<8x1xf32>
    %c0_10 = arith.constant 0 : index
    %c0_11 = arith.constant 0 : index
    %14 = vector.load %arg4[%c0_10, %c0_11] : memref<8x1xf32, #tpu.memory_space<vmem>>, vector<8x1xf32>
    tpu.vector_store %arg4[%c0_10, %c0_11], %13 {strides = array<i32>} : memref<8x1xf32, #tpu.memory_space<vmem>>, vector<8x1xf32>,
    %c1_i32 = arith.constant 1 : i32
    %15 = arith.cmpi eq, %arg0, %c1_i32 : i32
    %16 = arith.extui %15 : i1 to i32
    %c0_i32_12 = arith.constant 0 : i32
    %17 = arith.cmpi ne, %16, %c0_i32_12 : i32
    scf.if %17 {
      %c0_13 = arith.constant 0 : index
      %c0_14 = arith.constant 0 : index
      %18 = vector.load %arg3[%c0_13, %c0_14] : memref<8x8xf32, #tpu.memory_space<vmem>>, vector<8x8xf32>
      %c0_15 = arith.constant 0 : index
      %c0_16 = arith.constant 0 : index
      %19 = vector.load %arg4[%c0_15, %c0_16] : memref<8x1xf32, #tpu.memory_space<vmem>>, vector<8x1xf32>
      %cst_17 = arith.constant 2.000000e-06 : f32
      %20 = vector.broadcast %cst_17 : f32 to vector<8x1xf32>
      %21 = arith.mulf %20, %19 : vector<8x1xf32>
      %22 = vector.broadcast %21 : vector<8x1xf32> to vector<8x8xf32>
      %23 = arith.addf %18, %22 : vector<8x8xf32>
      %24 = tpu.iota {dimensions = array<i32: 0>} : vector<8x8xi32>
      %25 = tpu.iota {dimensions = array<i32: 1>} : vector<8x8xi32>
      %26 = arith.cmpi eq, %24, %25 : vector<8x8xi32>
      %cst_18 = arith.constant 0.000000e+00 : f32
      %27 = vector.broadcast %cst_18 : f32 to vector<8x8xf32>
      %28 = arith.select %26, %23, %27 : vector<8x8xi1>, vector<8x8xf32>
      %cst_19 = arith.constant dense<0.000000e+00> : vector<8xf32>
      %29 = vector.multi_reduction <add>, %28, %cst_19 [1] : vector<8x8xf32> to vector<8xf32>
      %30 = vector.shape_cast %29 : vector<8xf32> to vector<8x1xf32>
      %cst_20 = arith.constant dense<0.000000e+00> : vector<8xf32>
      %31 = vector.multi_reduction <add>, %28, %cst_20 [0] : vector<8x8xf32> to vector<8xf32>
      %32 = vector.shape_cast %31 : vector<8xf32> to vector<1x8xf32>
      %cst_21 = arith.constant 0.000000e+00 : f32
      %33 = vector.broadcast %cst_21 : f32 to vector<8x8xf32>
      %34 = arith.select %26, %18, %33 : vector<8x8xi1>, vector<8x8xf32>
      %cst_22 = arith.constant dense<0.000000e+00> : vector<8xf32>
      %35 = vector.multi_reduction <add>, %34, %cst_22 [0] : vector<8x8xf32> to vector<8xf32>
      %36 = vector.shape_cast %35 : vector<8xf32> to vector<1x8xf32>
      %37 = math.sqrt %30 : vector<8x1xf32>
      %cst_23 = arith.constant 9.99999993E-9 : f32
      %38 = vector.broadcast %cst_23 : f32 to vector<8x1xf32>
      %39 = arith.maximumf %37, %38 : vector<8x1xf32>
      %40 = math.sqrt %32 : vector<1x8xf32>
      %cst_24 = arith.constant 9.99999993E-9 : f32
      %41 = vector.broadcast %cst_24 : f32 to vector<1x8xf32>
      %42 = arith.maximumf %40, %41 : vector<1x8xf32>
      %43 = vector.broadcast %39 : vector<8x1xf32> to vector<8x8xf32>
      %44 = vector.broadcast %42 : vector<1x8xf32> to vector<8x8xf32>
      %45 = arith.mulf %43, %44 : vector<8x8xf32>
      %46 = arith.divf %23, %45 : vector<8x8xf32>
      %cst_25 = arith.constant -1.000000e+00 : f32
      %47 = vector.broadcast %cst_25 : f32 to vector<8x8xf32>
      %48 = arith.select %26, %47, %46 : vector<8x8xi1>, vector<8x8xf32>
      %cst_26 = arith.constant dense<0xFF800000> : vector<8xf32>
      %49 = vector.multi_reduction <maximumf>, %48, %cst_26 [1] : vector<8x8xf32> to vector<8xf32>
      %50 = vector.shape_cast %49 : vector<8xf32> to vector<8x1xf32>
      %51 = vector.broadcast %50 : vector<8x1xf32> to vector<8x8xf32>
      %52 = arith.cmpf oge, %48, %51 : vector<8x8xf32>
      %c8_i32 = arith.constant 8 : i32
      %53 = vector.broadcast %c8_i32 : i32 to vector<8x8xi32>
      %54 = arith.select %52, %25, %53 : vector<8x8xi1>, vector<8x8xi32>
      %cst_27 = arith.constant dense<2147483647> : vector<8xi32>
      %55 = vector.multi_reduction <minsi>, %54, %cst_27 [1] : vector<8x8xi32> to vector<8xi32>
      %56 = vector.shape_cast %55 : vector<8xi32> to vector<8x1xi32>
      %57 = vector.broadcast %56 : vector<8x1xi32> to vector<8x8xi32>
      %58 = arith.cmpi eq, %25, %57 : vector<8x8xi32>
      %59 = arith.extui %58 : vector<8x8xi1> to vector<8x8xi32>
      %60 = arith.sitofp %59 : vector<8x8xi32> to vector<8x8xf32>
      %cst_28 = arith.constant 2.000000e+00 : f32
      %61 = vector.broadcast %cst_28 : f32 to vector<8x8xf32>
      %62 = arith.mulf %61, %23 : vector<8x8xf32>
      %63 = vector.broadcast %36 : vector<1x8xf32> to vector<8x8xf32>
      %64 = arith.subf %63, %62 : vector<8x8xf32>
      %65 = arith.mulf %60, %64 : vector<8x8xf32>
      %cst_29 = arith.constant dense<0.000000e+00> : vector<8xf32>
      %66 = vector.multi_reduction <add>, %65, %cst_29 [1] : vector<8x8xf32> to vector<8xf32>
      %67 = vector.shape_cast %66 : vector<8xf32> to vector<8x1xf32>
      %cst_30 = arith.constant 2.000000e-06 : f32
      %68 = vector.broadcast %cst_30 : f32 to vector<8x1xf32>
      %69 = arith.mulf %68, %19 : vector<8x1xf32>
      %70 = arith.addf %30, %69 : vector<8x1xf32>
      %cst_31 = arith.constant 1.024000e-09 : f32
      %71 = vector.broadcast %cst_31 : f32 to vector<8x1xf32>
      %72 = arith.addf %70, %71 : vector<8x1xf32>
      %73 = arith.addf %72, %67 : vector<8x1xf32>
      %cst_32 = arith.constant 1.024000e-09 : f32
      %74 = vector.broadcast %cst_32 : f32 to vector<8x1xf32>
      %75 = arith.maximumf %73, %74 : vector<8x1xf32>
      %76 = math.log %75 : vector<8x1xf32>
      %77 = vector.shape_cast %76 : vector<8x1xf32> to vector<1x8x1xf32>
      %cst_33 = arith.constant dense<0.000000e+00> : vector<1xf32>
      %78 = vector.multi_reduction <add>, %77, %cst_33 [1, 2] : vector<1x8x1xf32> to vector<1xf32>
      %79 = vector.shape_cast %78 : vector<1xf32> to vector<1x1x1xf32>
      %80 = vector.extract %79[0, 0, 0] : f32 from vector<1x1x1xf32>
      %cst_34 = arith.constant 8.000000e+00 : f32
      %81 = arith.divf %80, %cst_34 : f32
      %cst_35 = arith.constant -5.000000e-01 : f32
      %82 = arith.mulf %cst_35, %81 : f32
      %c0_36 = arith.constant 0 : index
      %c0_37 = arith.constant 0 : index
      %83 = memref.load %arg2[%c0_36, %c0_37] : memref<1x1xf32, #tpu.memory_space<smem>>
      memref.store %82, %arg2[%c0_36, %c0_37] : memref<1x1xf32, #tpu.memory_space<smem>>
    } else {
    }
    return
  }
  func.func @transform_0(%arg0: i32) -> (i32, i32) {
    %c0_i32 = arith.constant 0 : i32
    %c0_i32_0 = arith.constant 0 : i32
    return %c0_i32, %arg0 : i32, i32
  }
  func.func @transform_1(%arg0: i32) -> (i32, i32) {
    %c0_i32 = arith.constant 0 : i32
    %c0_i32_0 = arith.constant 0 : i32
    %c0_i32_1 = arith.constant 0 : i32
    return %c0_i32, %c0_i32_0 : i32, i32
  }
}

</mosaic_0001>

<llo_original>
// kernel: tpu_custom_call.1
$region0: #{tpu_custom_call.1}
  #allocation0 [shape = 'u32[]', space=smem, size = 0x4, offset = 0x4, fixed_abs, tag = 'smem constant byte address 0x4 - core index']
  #allocation1 [shape = 'u32[72,128]{1,0:T(1,128)}', space=vmem, size = 0x9000, scoped, tag = 'internal scratch']
  #allocation2 [shape = 'f32[8,8]{1,0:T(8,128)}', space=vmem, size = 0x1000, scoped, tag = 'scratch operand']
  #allocation3 [shape = 'f32[8,1]{1,0:T(8,128)}', space=vmem, size = 0x1000, scoped, tag = 'scratch operand']
  %s0 = inlined_call_operand.hbm [shape: f32[8,1024], index: 0, kind: input, shape index: {}]
  %s1 = inlined_call_operand.hbm [shape: f32[1,1], index: 1, kind: output, shape index: {}]
  %s2 = sld [smem:[#allocation0]]
  $region49: #{tpu_custom_call.1} parent=0
    _
  %s4 = ssub.s32 1, %s2
  %s5 = scalar_select 0, %s4, %s2
  $region1: #{tpu_custom_call.1} parent=0
    #allocation4 [shape = 'u8[32768]{0}', space=vmem, size = 0x8000, scoped, tag = 'input window, operand 0']
    #allocation5 [shape = 's32[2]{0}', space=sflag, size = 0x8, scoped, tag = 'scoped memory for tpu_custom_call.1']
    #allocation6 [shape = 's32[2]{0}', space=sflag, size = 0x8, scoped, tag = 'scoped memory for tpu_custom_call.1']
    #allocation7 [shape = 'u8[512]{0}', space=smem, size = 0x200, scoped, tag = 'output window, operand 0, single buffered']
    %6 = vsyncpa [#allocation5], 0
    %s7 = scalar_lea.sflag [#allocation5], 1
    %8 = vsyncpa %s7, 0
    %9 = vsyncpa [#allocation6], 0
    loop: start=0, step=1, limit=4
    $region2: #{tpu_custom_call.1} parent=1 // loop_pre_header
      _
    $region3: #{tpu_custom_call.1} parent=1 // loop_header
      %s11 = sphi 0, %s15
      %p12 = scmp.ge.s32.totalorder %s11, 4
      %s21 = sphi 0, %s23
      %s24 = sphi 0, %s21
      %s25 = sphi 0, %s24
      %s41 = sphi 0, %s25
      %s45 = sphi 0, %s45
      %s47 = sphi 0, %s45
      %s48 = sphi 0, %s47
      %s62 = sphi 0, %s48
    $region4: #{tpu_custom_call.1} parent=1 // loop_header_branch
      %14 = sbr.rel (%p12) target = $region8
    $region5: #{tpu_custom_call.1} parent=1 // loop_body
      %s16 = ssub.s32 %s11, 1
      %s17 = ssub.s32 %s11, 2
      %s18 = sadd.s32 %s11, 1
      %s19 = ssub.s32 %s11, %s18
      %p20 = scmp.eq.s32.totalorder %s19, 0
      %s22 = sadd.s32 %s21, 1
      %s23 = scalar_select %p20, %s21, %s22
      %p26 = pneg %p20
      %p27 = scmp.eq.s32.totalorder %s11, 1
      %p28 = por %p26, %p27
      %p29 = scmp.ne.s32.totalorder %s21, %s24
      %p30 = scmp.eq.s32.totalorder %s11, 0
      %p31 = por %p29, %p30
      %p32 = scmp.ne.s32.totalorder %s21, %s24
      %p33 = scmp.eq.s32.totalorder %s16, 1
      %p34 = por %p32, %p33
      %p35 = scmp.ne.s32.totalorder %s24, %s25
      %p36 = scmp.eq.s32.totalorder %s16, 0
      %p37 = por %p35, %p36
      %p38 = scmp.ne.s32.totalorder %s24, %s25
      %p39 = scmp.eq.s32.totalorder %s17, 1
      %p40 = por %p38, %p39
      %p42 = scmp.ne.s32.totalorder %s25, %s41
      %p43 = scmp.eq.s32.totalorder %s17, 0
      %p44 = por %p42, %p43
      %s46 = sadd.s32 %s45, 1
      %p49 = scmp.eq.s32.totalorder %s11, 1
      %p50 = scmp.ne.s32.totalorder %s45, %s47
      %p51 = scmp.eq.s32.totalorder %s11, 0
      %p52 = por %p50, %p51
      %p53 = scmp.ne.s32.totalorder %s45, %s47
      %p54 = scmp.eq.s32.totalorder %s16, 1
      %p55 = por %p53, %p54
      %p56 = scmp.ne.s32.totalorder %s47, %s48
      %p57 = scmp.eq.s32.totalorder %s16, 0
      %p58 = por %p56, %p57
      %p59 = scmp.ne.s32.totalorder %s47, %s48
      %p60 = scmp.eq.s32.totalorder %s17, 1
      %p61 = por %p59, %p60
      %p63 = scmp.ne.s32.totalorder %s48, %s62
      %p64 = scmp.eq.s32.totalorder %s17, 0
      %p65 = por %p63, %p64
      %p66 = scmp.le.s32.totalorder 1, %s11
      %p67 = scmp.lt.s32.totalorder %s11, 3
      %p68 = pnand %p66, %p67
      %p69 = pneg %p68
      // Predicated region
      $region9: #{tpu_custom_call.1} parent=5 // pred_check
        _
      $region10: #{tpu_custom_call.1} parent=5 // pred_check_branch
        %71 = sbr.rel (%p68) target = $region12
      $region11: #{tpu_custom_call.1} parent=5 // pred_region
        %s72 = ssub.s32 %s11, 1
      $region12: #{tpu_custom_call.1} parent=5 // pred_fallthru
        _
      %p73 = scmp.lt.s32.totalorder %s11, 2
      // Predicated region
      $region13: #{tpu_custom_call.1} parent=5 // pred_check
        %p74 = pneg %p73
      $region14: #{tpu_custom_call.1} parent=5 // pred_check_branch
        %76 = sbr.rel (%p74) target = $region16
      $region15: #{tpu_custom_call.1} parent=5 // pred_region
        // Predicated region
        $region17: #{tpu_custom_call.1} parent=15 // pred_check
          %p77 = pneg %p31
        $region18: #{tpu_custom_call.1} parent=15 // pred_check_branch
          %79 = sbr.rel (%p77) target = $region20
        $region19: #{tpu_custom_call.1} parent=15 // pred_region
          %s80 = sand.u32 %s21, 1
          %s81 = scalar_lea.sflag [#allocation5], %s80
          %s82 = sand.u32 %s21, 1
          %s83 = smul.addr %s82, 32
          %s84 = scalar_lea.vmem [#allocation4], %s83
          %s85 = smul.u32 4, %s11
          %87 = vsyncadd %s81, 0
          %s88 = smul.addr %s85, 8
          %s89 = scalar_lea.hbm %s0, %s88
          %s91 = sshll.u32 %s89, 4
          %s92 = int_to_ptr.hbm [resolvable:$true] %s91
          %s93 = sshll.u32 %s84, 4
          %s94 = int_to_ptr.vmem [resolvable:$true] %s93
          %96 = dma.hbm_to_vmem [thread:$0]  %s92, 512, %s94, %s81
        $region20: #{tpu_custom_call.1} parent=15 // pred_fallthru
          _
      $region16: #{tpu_custom_call.1} parent=5 // pred_fallthru
        _
      %p97 = scmp.le.s32.totalorder 1, %s11
      %p98 = scmp.lt.s32.totalorder %s11, 3
      %p99 = pnand %p97, %p98
      %p100 = pneg %p99
      // Predicated region
      $region21: #{tpu_custom_call.1} parent=5 // pred_check
        _
      $region22: #{tpu_custom_call.1} parent=5 // pred_check_branch
        %102 = sbr.rel (%p99) target = $region24
      $region23: #{tpu_custom_call.1} parent=5 // pred_region
        %s103 = ssub.s32 %s11, 1
        %s104 = sand.u32 %s24, 1
        %s105 = scalar_lea.sflag [#allocation5], %s104
        %s106 = sand.u32 %s24, 1
        %s107 = smul.addr %s106, 32
        %s108 = scalar_lea.vmem [#allocation4], %s107
        // Predicated region
        $region25: #{tpu_custom_call.1} parent=23 // pred_check
          %p109 = pneg %p37
        $region26: #{tpu_custom_call.1} parent=23 // pred_check_branch
          %111 = sbr.rel (%p109) target = $region28
        $region27: #{tpu_custom_call.1} parent=23 // pred_region
          %113 = dma.done %s105, 512
        $region28: #{tpu_custom_call.1} parent=23 // pred_fallthru
          _
        %s114 = sand.u32 %s24, 1
        %s115 = scalar_lea.sflag [#allocation5], %s114
        %s116 = sand.u32 %s24, 1
        %s117 = smul.addr %s116, 32
        %s118 = scalar_lea.vmem [#allocation4], %s117
        %p119 = pneg %p37
        %p120 = pneg %p34
        %p121 = pneg %p58
        %p122 = pneg %p55
        %s123 = smul.u32 4, %s16
        %p124 = scmp.eq.s32.totalorder %s16, 0
        // Predicated region
        $region29: #{tpu_custom_call.1} parent=23 // pred_check
          %p125 = pneg %p124
        $region30: #{tpu_custom_call.1} parent=23 // pred_check_branch
          %127 = sbr.rel (%p125) target = $region32
        $region31: #{tpu_custom_call.1} parent=23 // pred_region
          %vm128 = vcmask 64512
          %129 = vst.msk [vmem:[#allocation2] sm:$0xff] %vm128, 0.0
          %vm130 = vcmask 7168
          %131 = vst.msk [vmem:[#allocation3] sm:$0xff] %vm130, 0.0
        $region32: #{tpu_custom_call.1} parent=23 // pred_fallthru
          _
        %v132 = vld [vmem:[%s108] sm:$0xff]
        %v133 = vld [vmem:[%s108 + $0x8] sm:$0xff]
        %v134 = vld [vmem:[%s108 + $0x10] sm:$0xff]
        %v135 = vld [vmem:[%s108 + $0x18] sm:$0xff]
        %v136 = vld [vmem:[#allocation2] sm:$0xff]
        %v137 = vsub.f32 %v132, 2e-06
        %v138 = vsub.f32 %v133, 2e-06
        %v139 = vsub.f32 %v134, 2e-06
        %v140 = vsub.f32 %v135, 2e-06
        %141 = vmatpush.xpose.msra.mxu0 0.0
        %142 = vmatpush.xpose.msra.mxu0 0.0
        %143 = vmatpush.xpose.msra.mxu0 0.0
        %144 = vmatpush.xpose.msra.mxu0 0.0
        %145 = vmatpush.xpose.msra.mxu0 0.0
        %146 = vmatpush.xpose.msra.mxu0 0.0
        %147 = vmatpush.xpose.msra.mxu0 0.0
        %148 = vmatpush.xpose.msra.mxu0 0.0
        %149 = vmatpush.xpose.msra.mxu0 0.0
        %150 = vmatpush.xpose.msra.mxu0 0.0
        %151 = vmatpush.xpose.msra.mxu0 0.0
        %152 = vmatpush.xpose.msra.mxu0 0.0
        %153 = vmatpush.xpose.msra.mxu0 0.0
        %154 = vmatpush.xpose.msra.mxu0 0.0
        %155 = vmatpush.xpose.msra.mxu0 0.0
        %156 = vmatpush.xpose.msra.mxu0 %v137
        %157 = vmatmul.f32.gmra.mxu0 %v132
        %v158 = vpop.f32.mrf.mxu0
        %v159 = vadd.f32 0.0, %v158
        %160 = vdwg.mxu0
        %161 = vmatpush.xpose.msra.mxu0 0.0
        %162 = vmatpush.xpose.msra.mxu0 0.0
        %163 = vmatpush.xpose.msra.mxu0 0.0
        %164 = vmatpush.xpose.msra.mxu0 0.0
        %165 = vmatpush.xpose.msra.mxu0 0.0
        %166 = vmatpush.xpose.msra.mxu0 0.0
        %167 = vmatpush.xpose.msra.mxu0 0.0
        %168 = vmatpush.xpose.msra.mxu0 0.0
        %169 = vmatpush.xpose.msra.mxu0 0.0
        %170 = vmatpush.xpose.msra.mxu0 0.0
        %171 = vmatpush.xpose.msra.mxu0 0.0
        %172 = vmatpush.xpose.msra.mxu0 0.0
        %173 = vmatpush.xpose.msra.mxu0 0.0
        %174 = vmatpush.xpose.msra.mxu0 0.0
        %175 = vmatpush.xpose.msra.mxu0 0.0
        %176 = vmatpush.xpose.msra.mxu0 %v138
        %177 = vmatmul.f32.gmra.mxu0 %v133
        %v178 = vpop.f32.mrf.mxu0
        %v179 = vadd.f32 %v159, %v178
        %180 = vdwg.mxu0
        %181 = vmatpush.xpose.msra.mxu0 0.0
        %182 = vmatpush.xpose.msra.mxu0 0.0
        %183 = vmatpush.xpose.msra.mxu0 0.0
        %184 = vmatpush.xpose.msra.mxu0 0.0
        %185 = vmatpush.xpose.msra.mxu0 0.0
        %186 = vmatpush.xpose.msra.mxu0 0.0
        %187 = vmatpush.xpose.msra.mxu0 0.0
        %188 = vmatpush.xpose.msra.mxu0 0.0
        %189 = vmatpush.xpose.msra.mxu0 0.0
        %190 = vmatpush.xpose.msra.mxu0 0.0
        %191 = vmatpush.xpose.msra.mxu0 0.0
        %192 = vmatpush.xpose.msra.mxu0 0.0
        %193 = vmatpush.xpose.msra.mxu0 0.0
        %194 = vmatpush.xpose.msra.mxu0 0.0
        %195 = vmatpush.xpose.msra.mxu0 0.0
        %196 = vmatpush.xpose.msra.mxu0 %v139
        %197 = vmatmul.f32.gmra.mxu0 %v134
        %v198 = vpop.f32.mrf.mxu0
        %v199 = vadd.f32 %v179, %v198
        %200 = vdwg.mxu0
        %201 = vmatpush.xpose.msra.mxu0 0.0
        %202 = vmatpush.xpose.msra.mxu0 0.0
        %203 = vmatpush.xpose.msra.mxu0 0.0
        %204 = vmatpush.xpose.msra.mxu0 0.0
        %205 = vmatpush.xpose.msra.mxu0 0.0
        %206 = vmatpush.xpose.msra.mxu0 0.0
        %207 = vmatpush.xpose.msra.mxu0 0.0
        %208 = vmatpush.xpose.msra.mxu0 0.0
        %209 = vmatpush.xpose.msra.mxu0 0.0
        %210 = vmatpush.xpose.msra.mxu0 0.0
        %211 = vmatpush.xpose.msra.mxu0 0.0
        %212 = vmatpush.xpose.msra.mxu0 0.0
        %213 = vmatpush.xpose.msra.mxu0 0.0
        %214 = vmatpush.xpose.msra.mxu0 0.0
        %215 = vmatpush.xpose.msra.mxu0 0.0
        %216 = vmatpush.xpose.msra.mxu0 %v140
        %217 = vmatmul.f32.gmra.mxu0 %v135
        %v218 = vpop.f32.mrf.mxu0
        %v219 = vadd.f32 %v199, %v218
        %220 = vdwg.mxu0
        %v221 = vadd.f32 %v136, %v219
        %vm222 = vcmask 64512
        %223 = vst.msk [vmem:[#allocation2] sm:$0xff] %vm222, %v221
        %v224 = vld [vmem:[#allocation3] sm:$0xff]
        %v225 = vadd.f32 %v132, %v133
        %v226 = vadd.f32 %v225, %v134
        %v227 = vadd.f32 %v226, %v135
        %228 = vadd.xlane.f32.xlu0 %v227
        %v229 = vpop.xlane.xlu0 %228
        %v230 = vadd.f32 %v224, %v229
        %vm231 = vcmask 7168
        %232 = vst.msk [vmem:[#allocation3] sm:$0xff] %vm231, %v230
        %p233 = scmp.eq.s32.totalorder %s16, 1
        // Predicated region
        $region33: #{tpu_custom_call.1} parent=23 // pred_check
          %p234 = pneg %p233
        $region34: #{tpu_custom_call.1} parent=23 // pred_check_branch
          %236 = sbr.rel (%p234) target = $region36
        $region35: #{tpu_custom_call.1} parent=23 // pred_region
          %v237 = vld [vmem:[#allocation2] sm:$0xff]
          %v238 = vld [vmem:[#allocation3] sm:$0xff]
          %v239 = vmul.f32 %v238, 2e-06
          %241 = vset.pattern.permute.xlu0 0
          %242 = vperm.xlu0 %241, %v239
          %v243 = vpop.permute.xlu0 %242
          %v245 = vadd.f32 %v237, %v243
          %v246 = vlaneseq
          %v247 = vshrl.u32 %v246, 7
          %v248 = vlaneseq
          %v249 = vand.u32 %v248, 127
          %vm250 = vcmp.eq.s32.totalorder %v247, %v249
          %v251 = vsel %vm250, %v245, 0.0
          %v252 = vsel %vm222, %v251, 0.0
          %253 = vadd.xlane.f32.xlu0 %v252
          %v254 = vpop.xlane.xlu0 %253
          %v255 = vrot.slane %v252, 4
          %v256 = vadd.f32 %v252, %v255
          %v257 = vrot.slane %v256, 2
          %v258 = vadd.f32 %v256, %v257
          %v259 = vrot.slane %v258, 1
          %v260 = vadd.f32 %v258, %v259
          %v261 = vsel %vm250, %v237, 0.0
          %v262 = vsel %vm222, %v261, 0.0
          %v263 = vrot.slane %v262, 4
          %v264 = vadd.f32 %v262, %v263
          %v265 = vrot.slane %v264, 2
          %v266 = vadd.f32 %v264, %v265
          %v267 = vrot.slane %v266, 1
          %v268 = vadd.f32 %v266, %v267
          %v269 = vrsqrt.pop %v254
          %v270 = vmul.f32 %v269, %v254
          %v271 = vmul.f32 %v270, %v269
          %v272 = vmul.f32 0.5, %v271
          %v273 = vsub.f32 1.5, %v272
          %v274 = vmul.f32 %v269, %v273
          %v275 = vmul.f32 %v254, %v274
          %vm276 = vcmp.eq.f32.partialorder %v254, inf
          %v277 = vsel %vm276, %v254, %v275
          %vm278 = vcmp.eq.f32.partialorder %v254, 0.0
          %v279 = vand.u32 %v254, 2147483648
          %v280 = vsel %vm278, %v279, %v277
          %v281 = vmax.f32 %v280, 1e-08
          %v282 = vrsqrt.pop %v260
          %v283 = vmul.f32 %v282, %v260
          %v284 = vmul.f32 %v283, %v282
          %v285 = vmul.f32 0.5, %v284
          %v286 = vsub.f32 1.5, %v285
          %v287 = vmul.f32 %v282, %v286
          %v288 = vmul.f32 %v260, %v287
          %vm289 = vcmp.eq.f32.partialorder %v260, inf
          %v290 = vsel %vm289, %v260, %v288
          %vm291 = vcmp.eq.f32.partialorder %v260, 0.0
          %v292 = vand.u32 %v260, 2147483648
          %v293 = vsel %vm291, %v292, %v290
          %v294 = vmax.f32 %v293, 1e-08
          %v295 = vmul.f32 %v281, %v294
          %v296 = vrcp.pop %v295
          %v297 = vmul.f32 %v295, %v296
          %v298 = vsub.f32 1.0, %v297
          %v299 = vmul.f32 %v296, %v298
          %v300 = vadd.f32 %v296, %v299
          %vm301 = vweird.f32 %v295
          %vm302 = vweird.f32 %v296
          %vm303 = vmor %vm301, %vm302
          %v304 = vsel %vm303, %v296, %v300
          %v305 = vand.u32 2147483647, %v295
          %vm306 = vcmp.eq.f32.partialorder %v305, 8.507059e+37
          %v307 = vand.u32 %v295, 2147483648
          %v308 = vor.u32 1.1754944e-38, %v307
          %v309 = vsel %vm306, %v308, %v304
          %v310 = vmul.f32 %v245, %v309
          %v311 = vsel %vm250, -1.0, %v310
          %v312 = vsel %vm222, %v311, -inf
          %313 = vmax.xlane.f32.xlu0 %v312
          %v314 = vpop.xlane.xlu0 %313
          %vm315 = vcmp.ge.f32.partialorder %v311, %v314
          %v316 = vsel %vm315, %v249, 8
          %v317 = vsel %vm222, %v316, 2147483647
          %v318 = vand.u32 %v317, 65535
          %v319 = vshra.s32 %v317, 16
          %v320 = vcvt.s32.f32 %v318
          %v321 = vcvt.s32.f32 %v319
          %322 = vmin.xlane.f32.xlu0 %v321
          %v323 = vpop.xlane.xlu0 %322
          %vm324 = vcmp.eq.f32.partialorder %v321, %v323
          %v325 = vsel %vm324, %v320, inf
          %326 = vmin.xlane.f32.xlu0 %v325
          %v327 = vpop.xlane.xlu0 %326
          %v328 = vcvt.f32.s32 %v327
          %v329 = vcvt.f32.s32 %v323
          %v330 = vshll.u32 %v329, 16
          %v331 = vadd.s32 %v330, %v328
          %vm332 = vcmp.eq.s32.totalorder %v249, %v331
          %v333 = vsel %vm332, 1, 0
          %v334 = vcvt.s32.f32 %v333
          %v335 = vmul.f32 %v245, 2.0
          %v336 = vsub.f32 %v268, %v335
          %v337 = vmul.f32 %v334, %v336
          %v338 = vsel %vm222, %v337, 0.0
          %339 = vadd.xlane.f32.xlu0 %v338
          %v340 = vpop.xlane.xlu0 %339
          %v341 = vadd.f32 %v254, %v239
          %v342 = vadd.f32 %v341, 1.024e-09
          %v343 = vadd.f32 %v342, %v340
          %v344 = vmax.f32 %v343, 1.024e-09
          %v345 = vlog2.pop %v344
          %v346 = vmul.f32 %v345, 0.6931472
          %v347 = vsel %vm231, %v346, 0.0
          %348 = vadd.xlane.f32.xlu0 %v347
          %v349 = vpop.xlane.xlu0 %348
          %v350 = vrot.slane %v349, 4
          %v351 = vadd.f32 %v349, %v350
          %v352 = vrot.slane %v351, 2
          %v353 = vadd.f32 %v351, %v352
          %v354 = vrot.slane %v353, 1
          %v355 = vadd.f32 %v353, %v354
          %s356 = vtos %v355
          %v357 = vrcp.pop 8.0
          %v358 = vmul.f32 8.0, %v357
          %v359 = vsub.f32 1.0, %v358
          %v360 = vmul.f32 %v357, %v359
          %v361 = vadd.f32 %v357, %v360
          %vm362 = vweird.f32 %v357
          %v363 = vsel %vm362, %v357, %v361
          %s364 = vtos %v363
          %s365 = smul.f32 %s356, %s364
          %s366 = smul.f32 %s365, -0.5
          %s367 = scalar_lea.smem [#allocation7], 0
          %368 = sst [smem:[%s367]] %s366
        $region36: #{tpu_custom_call.1} parent=23 // pred_fallthru
          _
        // Predicated region
        $region37: #{tpu_custom_call.1} parent=23 // pred_check
          %p369 = pneg %p55
        $region38: #{tpu_custom_call.1} parent=23 // pred_check_branch
          %371 = sbr.rel (%p369) target = $region40
        $region39: #{tpu_custom_call.1} parent=23 // pred_region
          %373 = vsyncadd [#allocation6], 0
          %s375 = sshll.u32 %s1, 4
          %s376 = int_to_ptr.hbm [resolvable:$true] %s375
          %378 = dma.smem_to_hbm [#allocation7], 16, %s376, [#allocation6]
        $region40: #{tpu_custom_call.1} parent=23 // pred_fallthru
          _
        // Predicated region
        $region41: #{tpu_custom_call.1} parent=23 // pred_check
          %p379 = pneg %p55
        $region42: #{tpu_custom_call.1} parent=23 // pred_check_branch
          %381 = sbr.rel (%p379) target = $region44
        $region43: #{tpu_custom_call.1} parent=23 // pred_region
          %383 = dma.done [#allocation6], 16
        $region44: #{tpu_custom_call.1} parent=23 // pred_fallthru
          _
        %384 = sfence
      $region24: #{tpu_custom_call.1} parent=5 // pred_fallthru
        _
      %p385 = scmp.le.s32.totalorder 2, %s11
      // Predicated region
      $region45: #{tpu_custom_call.1} parent=5 // pred_check
        %p386 = pneg %p385
      $region46: #{tpu_custom_call.1} parent=5 // pred_check_branch
        %388 = sbr.rel (%p386) target = $region48
      $region47: #{tpu_custom_call.1} parent=5 // pred_region
        %s389 = ssub.s32 %s11, 2
      $region48: #{tpu_custom_call.1} parent=5 // pred_fallthru
        _
    $region6: #{tpu_custom_call.1} parent=1 // loop_footer
      %s15 = sadd.s32 1, %s11
    $region7: #{tpu_custom_call.1} parent=1 // loop_footer_branch
      %10 = sbr.rel target = $region3
    $region8: #{tpu_custom_call.1} parent=1 // loop_exit
      _
    %390 = vsyncpa [#allocation5], 1
    %s391 = scalar_lea.sflag [#allocation5], 1
    %392 = vsyncpa %s391, 1
    %393 = vsyncpa [#allocation6], 1
    %s394 = scalar_lea.sflag [#allocation6], 1
    %395 = vsyncpa %s394, 1

</llo_original>
